<compile_context>
chip_gen: v5e
topology: v5e:2x2
jax: 0.10.0
libtpu: 0.0.40
codegen_flags: <defaults>
</compile_context>

<pallas_src>
import functools

import jax
import jax.numpy as jnp
from jax import lax
from jax.experimental import pallas as pl
from jax.experimental.pallas import tpu as pltpu

# ---------------- model hyper-params (small, consistent with the module) ----------------
VOCAB_SIZE = 100
EMBED_SIZE = 32
NUM_CLASSES = 4
MAX_LEN = 16
BATCH = 2
NUM_FILTERS = 128
KERNEL_SIZES = (3, 4, 5)
VPAD = 128          # vocab padded to one full 128-lane slot per conv tap
NCLS_PAD = 128      # lane-dense classifier output (slice to NUM_CLASSES in wrapper)


def _round_up(v, m):
    return ((v + m - 1) // m) * m


def _textcnn_kernel(ids_ref, wconv_ref, bconv_ref, mask_ref, wfc_ref, bfc_ref,
                    out_ref, *, B, Tpad):
    F3 = 3 * NUM_FILTERS

    # ---- im2col one-hot: ids already carry the per-tap offset (dh*VPAD) and are
    # replicated across each 128-lane tap slot; sentinel -1 rows select nothing. ----
    col = lax.broadcasted_iota(jnp.int32, ids_ref.shape, 1)        # (B*Tpad, kmax*VPAD)
    onehot = (col == ids_ref[...]).astype(jnp.float32)

    # ---- fused embedding-gather + 3-branch conv: ONE MXU matmul (K = kmax*128) ----
    acc = jnp.dot(onehot, wconv_ref[...],
                  preferred_element_type=jnp.float32) + bconv_ref[...]

    # ReLU, then zero out invalid trailing time rows per branch with one multiply
    # (safe: post-ReLU values are >= 0 and every branch has >= 1 valid step).
    acc = jnp.maximum(acc, 0.0) * mask_ref[...]                    # (B*Tpad, 3F)

    # max over time per branch (branches already concatenated along lanes)
    pooled = jnp.max(acc.reshape(B, Tpad, F3), axis=1)             # (B, 3F)

    # Dropout: eval-mode identity.
    # TODO(synk): training-mode dropout (pltpu.prng_* masking) intentionally omitted.
    out_ref[...] = jnp.dot(pooled, wfc_ref[...],
                           preferred_element_type=jnp.float32) + bfc_ref[...]


def textcnn_forward(input_ids, packed):
    """input_ids: (B, L) int32 token ids. Returns (B, NUM_CLASSES) f32 logits."""
    B, L = input_ids.shape
    kmin, kmax = min(KERNEL_SIZES), max(KERNEL_SIZES)
    assert L >= kmax, "sequence shorter than the largest conv kernel"
    Tpad = _round_up(L - kmin + 1, 8)            # 14 -> 16
    F = NUM_FILTERS

    # shifted-window ids (B*Tpad, kmax), tap-offset, then replicated to a full
    # 128-lane slot per tap; out-of-range time positions get sentinel -1.
    pos = jnp.arange(Tpad)[:, None] + jnp.arange(kmax)[None, :]     # (Tpad, kmax)
    valid = pos < L
    win = input_ids[:, jnp.minimum(pos, L - 1)]                     # (B, Tpad, kmax)
    win = jnp.where(valid[None], win + jnp.arange(kmax)[None, None] * VPAD, -1)
    ids_exp = jnp.repeat(win.reshape(B * Tpad, kmax).astype(jnp.int32),
                         VPAD, axis=1)                              # (B*Tpad, kmax*VPAD)

    # precomputed 0/1 validity mask per (time-row, branch lane block)
    lims = jnp.asarray([L - k + 1 for k in KERNEL_SIZES], jnp.int32)
    t = jnp.arange(Tpad)[:, None]
    branch = jnp.arange(3 * F)[None, :] // F
    mask = (t < lims[branch]).astype(jnp.float32)                   # (Tpad, 3F)
    mask = jnp.tile(mask, (B, 1))                                   # (B*Tpad, 3F)

    kern = functools.partial(_textcnn_kernel, B=B, Tpad=Tpad)
    vmem = pl.BlockSpec(memory_space=pltpu.MemorySpace.VMEM)
    args = (ids_exp, packed["wconv"], packed["bconv"], mask,
            packed["wfc"], packed["bfc"])
    out = pl.pallas_call(
        kern,
        out_shape=jax.ShapeDtypeStruct((B, NCLS_PAD), jnp.float32),
        in_specs=[vmem] * len(args),
        out_specs=vmem,
    )(*args)
    return out[:, :NUM_CLASSES]


def init_params(key):
    ks = jax.random.split(key, 10)
    p = {}
    p["emb"] = jax.random.normal(ks[0], (VOCAB_SIZE, EMBED_SIZE), jnp.float32) * 0.1
    for i, (k, kk, bk) in enumerate(zip(KERNEL_SIZES, ks[1:4], ks[4:7]), start=1):
        # PyTorch conv weight (128, 1, k, E) stored as (k, E, 128)
        p[f"w{i}"] = jax.random.normal(kk, (k, EMBED_SIZE, NUM_FILTERS), jnp.float32) * 0.05
        p[f"b{i}"] = jax.random.normal(bk, (1, NUM_FILTERS), jnp.float32) * 0.01
    p["wfc"] = jax.random.normal(ks[7], (NUM_FILTERS * 3, NUM_CLASSES), jnp.float32) * 0.05
    p["bfc"] = jax.random.normal(ks[8], (1, NUM_CLASSES), jnp.float32) * 0.01
    return p


def pack_params(p):
    """Host-side packing: fold the embedding into the zero-padded fused conv weight.

    Wprime[dh*VPAD + v, i*F:(i+1)*F] = emb[v] @ w_i[dh]  (zero where dh >= k_i or v >= V)
    wfc/bfc are padded to a lane-dense 128-class output.
    """
    kmax = max(KERNEL_SIZES)
    F, V = NUM_FILTERS, VOCAB_SIZE
    hi = lax.Precision.HIGHEST
    wconv = jnp.zeros((kmax * VPAD, 3 * F), jnp.float32)
    bconv = jnp.zeros((1, 3 * F), jnp.float32)
    for i, k in enumerate(KERNEL_SIZES):
        w = p[f"w{i+1}"]                                   # (k, E, F)
        for dh in range(k):
            blk = jnp.dot(p["emb"], w[dh], precision=hi)   # (V, F)
            wconv = wconv.at[dh * VPAD:dh * VPAD + V, i * F:(i + 1) * F].set(blk)
        bconv = bconv.at[:, i * F:(i + 1) * F].set(p[f"b{i+1}"])
    wfc = jnp.zeros((3 * F, NCLS_PAD), jnp.float32).at[:, :NUM_CLASSES].set(p["wfc"])
    bfc = jnp.zeros((1, NCLS_PAD), jnp.float32).at[:, :NUM_CLASSES].set(p["bfc"])
    return {"wconv": wconv, "bconv": bconv, "wfc": wfc, "bfc": bfc}


def reference_forward(input_ids, params):
    """Pure-JAX reference mirroring the PyTorch forward (eval-mode dropout)."""
    hi = lax.Precision.HIGHEST
    x = jnp.take(params["emb"], input_ids, axis=0).astype(jnp.float32)   # (B, L, E)
    B, L, _ = x.shape
    feats = []
    for i, k in enumerate(KERNEL_SIZES, start=1):
        w, b = params[f"w{i}"], params[f"b{i}"]
        T = L - k + 1
        acc = jnp.zeros((B, T, NUM_FILTERS), jnp.float32)
        for dh in range(k):
            acc = acc + jnp.einsum("ble,ef->blf", x[:, dh:dh + T, :], w[dh],
                                   precision=hi)
        acc = jax.nn.relu(acc + b[None, :, :])
        feats.append(jnp.max(acc, axis=1))
    feat = jnp.concatenate(feats, axis=1)
    return jnp.dot(feat, params["wfc"], precision=hi) + params["bfc"]


if __name__ == "__main__":
    key = jax.random.PRNGKey(0)
    pkey, ikey = jax.random.split(key)
    params = init_params(pkey)
    packed = pack_params(params)

    input_ids = jax.random.randint(ikey, (BATCH, MAX_LEN), 0, VOCAB_SIZE,
                                   dtype=jnp.int32)
    # nn.Embedding would raise on out-of-range ids; the one-hot gather would
    # silently map them to a zero embedding, so guard here.
    assert bool(jnp.all((input_ids >= 0) & (input_ids < VOCAB_SIZE)))

    out = textcnn_forward(input_ids, packed)
    out = jax.block_until_ready(out)

    ref = reference_forward(input_ids, params)
    assert out.shape == (BATCH, NUM_CLASSES)
    assert jnp.allclose(out, ref, atol=1e-4, rtol=1e-4), "mismatch vs reference"
    print("KERNEL_OK")
</pallas_src>

<mosaic_0001>
module attributes {stable_mosaic.version = 11 : i64} {
  func.func @_textcnn_kernel(%arg0: memref<32x640xi32, #tpu.memory_space<vmem>>, %arg1: memref<640x384xf32, #tpu.memory_space<vmem>>, %arg2: memref<1x384xf32, #tpu.memory_space<vmem>>, %arg3: memref<32x384xf32, #tpu.memory_space<vmem>>, %arg4: memref<384x128xf32, #tpu.memory_space<vmem>>, %arg5: memref<1x128xf32, #tpu.memory_space<vmem>>, %arg6: memref<2x128xf32, #tpu.memory_space<vmem>>) attributes {dimension_semantics = [], scalar_prefetch = 0 : i64, scratch_operands = 0 : i64, tpu.core_type = #tpu.core_type<tc>} {
    %0 = tpu.iota {dimensions = array<i32: 1>} : vector<32x640xi32>
    %c0 = arith.constant 0 : index
    %c0_0 = arith.constant 0 : index
    %1 = vector.load %arg0[%c0, %c0_0] : memref<32x640xi32, #tpu.memory_space<vmem>>, vector<32x640xi32>
    %2 = arith.cmpi eq, %0, %1 : vector<32x640xi32>
    %3 = arith.extui %2 : vector<32x640xi1> to vector<32x640xi32>
    %4 = arith.sitofp %3 : vector<32x640xi32> to vector<32x640xf32>
    %c0_1 = arith.constant 0 : index
    %c0_2 = arith.constant 0 : index
    %5 = vector.load %arg1[%c0_1, %c0_2] : memref<640x384xf32, #tpu.memory_space<vmem>>, vector<640x384xf32>
    %cst = arith.constant dense<0.000000e+00> : vector<32x384xf32>
    %6 = tpu.matmul %4, %5, %cst {dimension_numbers = #tpu.dot_dimension_numbers<[1], [0], [0], [1], [0, 0, 1, 1], [], []>} : vector<32x640xf32>, vector<640x384xf32>, vector<32x384xf32> -> vector<32x384xf32>
    %c0_3 = arith.constant 0 : index
    %c0_4 = arith.constant 0 : index
    %7 = vector.load %arg2[%c0_3, %c0_4] : memref<1x384xf32, #tpu.memory_space<vmem>>, vector<1x384xf32>
    %8 = vector.broadcast %7 : vector<1x384xf32> to vector<32x384xf32>
    %9 = arith.addf %6, %8 : vector<32x384xf32>
    %cst_5 = arith.constant 0.000000e+00 : f32
    %10 = vector.broadcast %cst_5 : f32 to vector<32x384xf32>
    %11 = arith.maximumf %9, %10 : vector<32x384xf32>
    %c0_6 = arith.constant 0 : index
    %c0_7 = arith.constant 0 : index
    %12 = vector.load %arg3[%c0_6, %c0_7] : memref<32x384xf32, #tpu.memory_space<vmem>>, vector<32x384xf32>
    %13 = arith.mulf %11, %12 : vector<32x384xf32>
    %14 = vector.shape_cast %13 : vector<32x384xf32> to vector<2x16x384xf32>
    %cst_8 = arith.constant dense<0xFF800000> : vector<2x384xf32>
    %15 = vector.multi_reduction <maximumf>, %14, %cst_8 [1] : vector<2x16x384xf32> to vector<2x384xf32>
    %c0_9 = arith.constant 0 : index
    %c0_10 = arith.constant 0 : index
    %16 = vector.load %arg4[%c0_9, %c0_10] : memref<384x128xf32, #tpu.memory_space<vmem>>, vector<384x128xf32>
    %cst_11 = arith.constant dense<0.000000e+00> : vector<2x128xf32>
    %17 = tpu.matmul %15, %16, %cst_11 {dimension_numbers = #tpu.dot_dimension_numbers<[1], [0], [0], [1], [0, 0, 1, 1], [], []>} : vector<2x384xf32>, vector<384x128xf32>, vector<2x128xf32> -> vector<2x128xf32>
    %c0_12 = arith.constant 0 : index
    %c0_13 = arith.constant 0 : index
    %18 = vector.load %arg5[%c0_12, %c0_13] : memref<1x128xf32, #tpu.memory_space<vmem>>, vector<1x128xf32>
    %19 = vector.broadcast %18 : vector<1x128xf32> to vector<2x128xf32>
    %20 = arith.addf %17, %19 : vector<2x128xf32>
    %c0_14 = arith.constant 0 : index
    %c0_15 = arith.constant 0 : index
    %21 = vector.load %arg6[%c0_14, %c0_15] : memref<2x128xf32, #tpu.memory_space<vmem>>, vector<2x128xf32>
    tpu.vector_store %arg6[%c0_14, %c0_15], %20 {strides = array<i32>} : memref<2x128xf32, #tpu.memory_space<vmem>>, vector<2x128xf32>,
    return
  }
}

</mosaic_0001>

<llo_original>
// kernel: tpu_custom_call.1
$region0: #{tpu_custom_call.1}
  #allocation0 [shape = 'u32[]', space=smem, size = 0x4, offset = 0x4, fixed_abs, tag = 'smem constant byte address 0x4 - core index']
  #allocation1 [shape = 'u32[72,128]{1,0:T(1,128)}', space=vmem, size = 0x9000, scoped, tag = 'internal scratch']
  %s0 = inlined_call_operand.hbm [shape: s32[32,640], index: 0, kind: input, shape index: {}]
  %s1 = inlined_call_operand.hbm [shape: f32[640,384], index: 1, kind: input, shape index: {}]
  %s2 = inlined_call_operand.hbm [shape: f32[1,384], index: 2, kind: input, shape index: {}]
  %s3 = inlined_call_operand.hbm [shape: f32[32,384], index: 3, kind: input, shape index: {}]
  %s4 = inlined_call_operand.hbm [shape: f32[384,128], index: 4, kind: input, shape index: {}]
  %s5 = inlined_call_operand.vmem [shape: f32[1,128], index: 5, kind: input, shape index: {}]
  %s6 = inlined_call_operand.hbm [shape: f32[2,128], index: 6, kind: output, shape index: {}]
  %s7 = sld [smem:[#allocation0]]
  $region54: #{tpu_custom_call.1} parent=0
    _
  %s9 = ssub.s32 1, %s7
  %s10 = scalar_select 0, %s9, %s7
  $region1: #{tpu_custom_call.1} parent=0
    #allocation2 [shape = 'u8[81920]{0}', space=vmem, size = 0x14000, scoped, tag = 'input window, operand 0, single buffered']
    #allocation3 [shape = 's32[1]{0}', space=sflag, size = 0x4, scoped, tag = 'scoped memory for tpu_custom_call.1']
    #allocation4 [shape = 's32[1]{0}', space=sflag, size = 0x4, scoped, tag = 'scoped memory for tpu_custom_call.1']
    #allocation5 [shape = 'u8[983040]{0}', space=vmem, size = 0xf0000, scoped, tag = 'input window, operand 1, single buffered']
    #allocation6 [shape = 's32[1]{0}', space=sflag, size = 0x4, scoped, tag = 'scoped memory for tpu_custom_call.1']
    #allocation7 [shape = 'u8[1536]{0}', space=vmem, size = 0x800, scoped, tag = 'input window, operand 2, single buffered']
    #allocation8 [shape = 'u8[49152]{0}', space=vmem, size = 0xc000, scoped, tag = 'input window, operand 3, single buffered']
    #allocation9 [shape = 's32[1]{0}', space=sflag, size = 0x4, scoped, tag = 'scoped memory for tpu_custom_call.1']
    #allocation10 [shape = 'u8[196608]{0}', space=vmem, size = 0x30000, scoped, tag = 'input window, operand 4, single buffered']
    #allocation11 [shape = 'u8[1024]{0}', space=vmem, size = 0x400, scoped, tag = 'output window, operand 0, single buffered']
    %11 = vsyncpa [#allocation3], 0
    %12 = vsyncpa [#allocation6], 0
    %13 = vsyncpa [#allocation9], 0
    %14 = vsyncpa [#allocation4], 0
    // Predicated region
    $region2: #{tpu_custom_call.1} parent=1 // pred_check
      _
    $region3: #{tpu_custom_call.1} parent=1 // pred_check_branch
      %16 = sbr.rel (0) target = $region5
    $region4: #{tpu_custom_call.1} parent=1 // pred_region
      %18 = vsyncadd [#allocation3], 0
      %s19 = sshll.u32 %s0, 4
      %s20 = int_to_ptr.hbm [resolvable:$true] %s19
      %s21 = sshll.u32 [#allocation2], 4
      %s22 = int_to_ptr.vmem [resolvable:$true] %s21
      %27 = dma.hbm_to_vmem [thread:$0]  %s20, 2560, %s22, [#allocation3], 640, 640, 40
    $region5: #{tpu_custom_call.1} parent=1 // pred_fallthru
      _
    // Predicated region
    $region6: #{tpu_custom_call.1} parent=1 // pred_check
      _
    $region7: #{tpu_custom_call.1} parent=1 // pred_check_branch
      %29 = sbr.rel (0) target = $region9
    $region8: #{tpu_custom_call.1} parent=1 // pred_region
      %31 = vsyncadd [#allocation6], 0
      %s32 = sshll.u32 %s1, 4
      %s33 = int_to_ptr.hbm [resolvable:$true] %s32
      %s34 = sshll.u32 [#allocation5], 4
      %s35 = int_to_ptr.vmem [resolvable:$true] %s34
      %40 = dma.hbm_to_vmem [thread:$0]  %s33, 30720, %s35, [#allocation6], 384, 384, 24
    $region9: #{tpu_custom_call.1} parent=1 // pred_fallthru
      _
    // Predicated region
    $region10: #{tpu_custom_call.1} parent=1 // pred_check
      _
    $region11: #{tpu_custom_call.1} parent=1 // pred_check_branch
      %42 = sbr.rel (0) target = $region13
    $region12: #{tpu_custom_call.1} parent=1 // pred_region
      %44 = vsyncadd [#allocation6], 0
      %s46 = sshll.u32 %s2, 4
      %s47 = int_to_ptr.hbm [resolvable:$true] %s46
      %s48 = sshll.u32 [#allocation7], 4
      %s49 = int_to_ptr.vmem [resolvable:$true] %s48
      %51 = dma.hbm_to_vmem [thread:$0]  %s47, 48, %s49, [#allocation6]
    $region13: #{tpu_custom_call.1} parent=1 // pred_fallthru
      _
    // Predicated region
    $region14: #{tpu_custom_call.1} parent=1 // pred_check
      _
    $region15: #{tpu_custom_call.1} parent=1 // pred_check_branch
      %53 = sbr.rel (0) target = $region17
    $region16: #{tpu_custom_call.1} parent=1 // pred_region
      %55 = vsyncadd [#allocation9], 0
      %s56 = sshll.u32 %s3, 4
      %s57 = int_to_ptr.hbm [resolvable:$true] %s56
      %s58 = sshll.u32 [#allocation8], 4
      %s59 = int_to_ptr.vmem [resolvable:$true] %s58
      %64 = dma.hbm_to_vmem [thread:$0]  %s57, 1536, %s59, [#allocation9], 384, 384, 24
    $region17: #{tpu_custom_call.1} parent=1 // pred_fallthru
      _
    // Predicated region
    $region18: #{tpu_custom_call.1} parent=1 // pred_check
      _
    $region19: #{tpu_custom_call.1} parent=1 // pred_check_branch
      %66 = sbr.rel (0) target = $region21
    $region20: #{tpu_custom_call.1} parent=1 // pred_region
      %68 = vsyncadd [#allocation9], 0
      %s69 = sshll.u32 %s4, 4
      %s70 = int_to_ptr.hbm [resolvable:$true] %s69
      %s71 = sshll.u32 [#allocation10], 4
      %s72 = int_to_ptr.vmem [resolvable:$true] %s71
      %77 = dma.hbm_to_vmem [thread:$0]  %s70, 6144, %s72, [#allocation9], 128, 128, 8
    $region21: #{tpu_custom_call.1} parent=1 // pred_fallthru
      _
    // Predicated region
    $region22: #{tpu_custom_call.1} parent=1 // pred_check
      _
    $region23: #{tpu_custom_call.1} parent=1 // pred_check_branch
      %79 = sbr.rel (0) target = $region25
    $region24: #{tpu_custom_call.1} parent=1 // pred_region
      _
    $region25: #{tpu_custom_call.1} parent=1 // pred_fallthru
      _
    // Predicated region
    $region26: #{tpu_custom_call.1} parent=1 // pred_check
      _
    $region27: #{tpu_custom_call.1} parent=1 // pred_check_branch
      %81 = sbr.rel (0) target = $region29
    $region28: #{tpu_custom_call.1} parent=1 // pred_region
      %83 = dma.done [#allocation3], 2560
    $region29: #{tpu_custom_call.1} parent=1 // pred_fallthru
      _
    // Predicated region
    $region30: #{tpu_custom_call.1} parent=1 // pred_check
      _
    $region31: #{tpu_custom_call.1} parent=1 // pred_check_branch
      %85 = sbr.rel (0) target = $region33
    $region32: #{tpu_custom_call.1} parent=1 // pred_region
      %87 = dma.done [#allocation6], 30720
    $region33: #{tpu_custom_call.1} parent=1 // pred_fallthru
      _
    // Predicated region
    $region34: #{tpu_custom_call.1} parent=1 // pred_check
      _
    $region35: #{tpu_custom_call.1} parent=1 // pred_check_branch
      %89 = sbr.rel (0) target = $region37
    $region36: #{tpu_custom_call.1} parent=1 // pred_region
      %91 = dma.done [#allocation6], 48
    $region37: #{tpu_custom_call.1} parent=1 // pred_fallthru
      _
    // Predicated region
    $region38: #{tpu_custom_call.1} parent=1 // pred_check
      _
    $region39: #{tpu_custom_call.1} parent=1 // pred_check_branch
      %93 = sbr.rel (0) target = $region41
    $region40: #{tpu_custom_call.1} parent=1 // pred_region
      %95 = dma.done [#allocation9], 1536
    $region41: #{tpu_custom_call.1} parent=1 // pred_fallthru
      _
    // Predicated region
    $region42: #{tpu_custom_call.1} parent=1 // pred_check
      _
    $region43: #{tpu_custom_call.1} parent=1 // pred_check_branch
      %97 = sbr.rel (0) target = $region45
    $region44: #{tpu_custom_call.1} parent=1 // pred_region
      %99 = dma.done [#allocation9], 6144
    $region45: #{tpu_custom_call.1} parent=1 // pred_fallthru
      _
    %v100 = vlaneseq
    %v101 = vand.u32 %v100, 127
    %v102 = vadd.s32 %v101, 128
    %v103 = vadd.s32 %v101, 256
    %v104 = vadd.s32 %v101, 384
    %v105 = vadd.s32 %v101, 512
    %v106 = vld [vmem:[#allocation2] sm:$0xff]
    %v107 = vld [vmem:[#allocation2 + $0x8] sm:$0xff]
    %v108 = vld [vmem:[#allocation2 + $0x10] sm:$0xff]
    %v109 = vld [vmem:[#allocation2 + $0x18] sm:$0xff]
    %v110 = vld [vmem:[#allocation2 + $0x20] sm:$0xff]
    %v111 = vld [vmem:[#allocation2 + $0x28] sm:$0xff]
    %v112 = vld [vmem:[#allocation2 + $0x30] sm:$0xff]
    %v113 = vld [vmem:[#allocation2 + $0x38] sm:$0xff]
    %v114 = vld [vmem:[#allocation2 + $0x40] sm:$0xff]
    %v115 = vld [vmem:[#allocation2 + $0x48] sm:$0xff]
    %v116 = vld [vmem:[#allocation2 + $0x50] sm:$0xff]
    %v117 = vld [vmem:[#allocation2 + $0x58] sm:$0xff]
    %v118 = vld [vmem:[#allocation2 + $0x60] sm:$0xff]
    %v119 = vld [vmem:[#allocation2 + $0x68] sm:$0xff]
    %v120 = vld [vmem:[#allocation2 + $0x70] sm:$0xff]
    %v121 = vld [vmem:[#allocation2 + $0x78] sm:$0xff]
    %v122 = vld [vmem:[#allocation2 + $0x80] sm:$0xff]
    %v123 = vld [vmem:[#allocation2 + $0x88] sm:$0xff]
    %v124 = vld [vmem:[#allocation2 + $0x90] sm:$0xff]
    %v125 = vld [vmem:[#allocation2 + $0x98] sm:$0xff]
    %vm126 = vcmp.eq.s32.totalorder %v101, %v106
    %vm127 = vcmp.eq.s32.totalorder %v102, %v107
    %vm128 = vcmp.eq.s32.totalorder %v103, %v108
    %vm129 = vcmp.eq.s32.totalorder %v104, %v109
    %vm130 = vcmp.eq.s32.totalorder %v105, %v110
    %vm131 = vcmp.eq.s32.totalorder %v101, %v111
    %vm132 = vcmp.eq.s32.totalorder %v102, %v112
    %vm133 = vcmp.eq.s32.totalorder %v103, %v113
    %vm134 = vcmp.eq.s32.totalorder %v104, %v114
    %vm135 = vcmp.eq.s32.totalorder %v105, %v115
    %vm136 = vcmp.eq.s32.totalorder %v101, %v116
    %vm137 = vcmp.eq.s32.totalorder %v102, %v117
    %vm138 = vcmp.eq.s32.totalorder %v103, %v118
    %vm139 = vcmp.eq.s32.totalorder %v104, %v119
    %vm140 = vcmp.eq.s32.totalorder %v105, %v120
    %vm141 = vcmp.eq.s32.totalorder %v101, %v121
    %vm142 = vcmp.eq.s32.totalorder %v102, %v122
    %vm143 = vcmp.eq.s32.totalorder %v103, %v123
    %vm144 = vcmp.eq.s32.totalorder %v104, %v124
    %vm145 = vcmp.eq.s32.totalorder %v105, %v125
    %v146 = vsel %vm126, 1, 0
    %v147 = vsel %vm127, 1, 0
    %v148 = vsel %vm128, 1, 0
    %v149 = vsel %vm129, 1, 0
    %v150 = vsel %vm130, 1, 0
    %v151 = vsel %vm131, 1, 0
    %v152 = vsel %vm132, 1, 0
    %v153 = vsel %vm133, 1, 0
    %v154 = vsel %vm134, 1, 0
    %v155 = vsel %vm135, 1, 0
    %v156 = vsel %vm136, 1, 0
    %v157 = vsel %vm137, 1, 0
    %v158 = vsel %vm138, 1, 0
    %v159 = vsel %vm139, 1, 0
    %v160 = vsel %vm140, 1, 0
    %v161 = vsel %vm141, 1, 0
    %v162 = vsel %vm142, 1, 0
    %v163 = vsel %vm143, 1, 0
    %v164 = vsel %vm144, 1, 0
    %v165 = vsel %vm145, 1, 0
    %v166 = vcvt.s32.f32 %v146
    %v167 = vcvt.s32.f32 %v147
    %v168 = vcvt.s32.f32 %v148
    %v169 = vcvt.s32.f32 %v149
    %v170 = vcvt.s32.f32 %v150
    %v171 = vcvt.s32.f32 %v151
    %v172 = vcvt.s32.f32 %v152
    %v173 = vcvt.s32.f32 %v153
    %v174 = vcvt.s32.f32 %v154
    %v175 = vcvt.s32.f32 %v155
    %v176 = vcvt.s32.f32 %v156
    %v177 = vcvt.s32.f32 %v157
    %v178 = vcvt.s32.f32 %v158
    %v179 = vcvt.s32.f32 %v159
    %v180 = vcvt.s32.f32 %v160
    %v181 = vcvt.s32.f32 %v161
    %v182 = vcvt.s32.f32 %v162
    %v183 = vcvt.s32.f32 %v163
    %v184 = vcvt.s32.f32 %v164
    %v185 = vcvt.s32.f32 %v165
    %v186 = vld [vmem:[#allocation5] sm:$0xff]
    %v187 = vld [vmem:[#allocation5 + $0x8] sm:$0xff]
    %v188 = vld [vmem:[#allocation5 + $0x10] sm:$0xff]
    %v189 = vld [vmem:[#allocation5 + $0x18] sm:$0xff]
    %v190 = vld [vmem:[#allocation5 + $0x20] sm:$0xff]
    %v191 = vld [vmem:[#allocation5 + $0x28] sm:$0xff]
    %v192 = vld [vmem:[#allocation5 + $0x30] sm:$0xff]
    %v193 = vld [vmem:[#allocation5 + $0x38] sm:$0xff]
    %v194 = vld [vmem:[#allocation5 + $0x40] sm:$0xff]
    %v195 = vld [vmem:[#allocation5 + $0x48] sm:$0xff]
    %v196 = vld [vmem:[#allocation5 + $0x50] sm:$0xff]
    %v197 = vld [vmem:[#allocation5 + $0x58] sm:$0xff]
    %v198 = vld [vmem:[#allocation5 + $0x60] sm:$0xff]
    %v199 = vld [vmem:[#allocation5 + $0x68] sm:$0xff]
    %v200 = vld [vmem:[#allocation5 + $0x70] sm:$0xff]
    %v201 = vld [vmem:[#allocation5 + $0x78] sm:$0xff]
    %v202 = vld [vmem:[#allocation5 + $0x80] sm:$0xff]
    %v203 = vld [vmem:[#allocation5 + $0x88] sm:$0xff]
    %v204 = vld [vmem:[#allocation5 + $0x90] sm:$0xff]
    %v205 = vld [vmem:[#allocation5 + $0x98] sm:$0xff]
    %v206 = vld [vmem:[#allocation5 + $0xa0] sm:$0xff]
    %v207 = vld [vmem:[#allocation5 + $0xa8] sm:$0xff]
    %v208 = vld [vmem:[#allocation5 + $0xb0] sm:$0xff]
    %v209 = vld [vmem:[#allocation5 + $0xb8] sm:$0xff]
    %v210 = vld [vmem:[#allocation5 + $0xc0] sm:$0xff]
    %v211 = vld [vmem:[#allocation5 + $0xc8] sm:$0xff]
    %v212 = vld [vmem:[#allocation5 + $0xd0] sm:$0xff]
    %v213 = vld [vmem:[#allocation5 + $0xd8] sm:$0xff]
    %v214 = vld [vmem:[#allocation5 + $0xe0] sm:$0xff]
    %v215 = vld [vmem:[#allocation5 + $0xe8] sm:$0xff]
    %v216 = vld [vmem:[#allocation5 + $0xf0] sm:$0xff]
    %v217 = vld [vmem:[#allocation5 + $0xf8] sm:$0xff]
    %v218 = vld [vmem:[#allocation5 + $0x100] sm:$0xff]
    %v219 = vld [vmem:[#allocation5 + $0x108] sm:$0xff]
    %v220 = vld [vmem:[#allocation5 + $0x110] sm:$0xff]
    %v221 = vld [vmem:[#allocation5 + $0x118] sm:$0xff]
    %v222 = vld [vmem:[#allocation5 + $0x120] sm:$0xff]
    %v223 = vld [vmem:[#allocation5 + $0x128] sm:$0xff]
    %v224 = vld [vmem:[#allocation5 + $0x130] sm:$0xff]
    %v225 = vld [vmem:[#allocation5 + $0x138] sm:$0xff]
    %v226 = vld [vmem:[#allocation5 + $0x140] sm:$0xff]
    %v227 = vld [vmem:[#allocation5 + $0x148] sm:$0xff]
    %v228 = vld [vmem:[#allocation5 + $0x150] sm:$0xff]
    %v229 = vld [vmem:[#allocation5 + $0x158] sm:$0xff]
    %v230 = vld [vmem:[#allocation5 + $0x160] sm:$0xff]
    %v231 = vld [vmem:[#allocation5 + $0x168] sm:$0xff]
    %v232 = vld [vmem:[#allocation5 + $0x170] sm:$0xff]
    %v233 = vld [vmem:[#allocation5 + $0x178] sm:$0xff]
    %v234 = vld [vmem:[#allocation5 + $0x180] sm:$0xff]
    %v235 = vld [vmem:[#allocation5 + $0x188] sm:$0xff]
    %v236 = vld [vmem:[#allocation5 + $0x190] sm:$0xff]
    %v237 = vld [vmem:[#allocation5 + $0x198] sm:$0xff]
    %v238 = vld [vmem:[#allocation5 + $0x1a0] sm:$0xff]
    %v239 = vld [vmem:[#allocation5 + $0x1a8] sm:$0xff]
    %v240 = vld [vmem:[#allocation5 + $0x1b0] sm:$0xff]
    %v241 = vld [vmem:[#allocation5 + $0x1b8] sm:$0xff]
    %v242 = vld [vmem:[#allocation5 + $0x1c0] sm:$0xff]
    %v243 = vld [vmem:[#allocation5 + $0x1c8] sm:$0xff]
    %v244 = vld [vmem:[#allocation5 + $0x1d0] sm:$0xff]
    %v245 = vld [vmem:[#allocation5 + $0x1d8] sm:$0xff]
    %v246 = vld [vmem:[#allocation5 + $0x1e0] sm:$0xff]
    %v247 = vld [vmem:[#allocation5 + $0x1e8] sm:$0xff]
    %v248 = vld [vmem:[#allocation5 + $0x1f0] sm:$0xff]
    %v249 = vld [vmem:[#allocation5 + $0x1f8] sm:$0xff]
    %v250 = vld [vmem:[#allocation5 + $0x200] sm:$0xff]
    %v251 = vld [vmem:[#allocation5 + $0x208] sm:$0xff]
    %v252 = vld [vmem:[#allocation5 + $0x210] sm:$0xff]
    %v253 = vld [vmem:[#allocation5 + $0x218] sm:$0xff]
    %v254 = vld [vmem:[#allocation5 + $0x220] sm:$0xff]
    %v255 = vld [vmem:[#allocation5 + $0x228] sm:$0xff]
    %v256 = vld [vmem:[#allocation5 + $0x230] sm:$0xff]
    %v257 = vld [vmem:[#allocation5 + $0x238] sm:$0xff]
    %v258 = vld [vmem:[#allocation5 + $0x240] sm:$0xff]
    %v259 = vld [vmem:[#allocation5 + $0x248] sm:$0xff]
    %v260 = vld [vmem:[#allocation5 + $0x250] sm:$0xff]
    %v261 = vld [vmem:[#allocation5 + $0x258] sm:$0xff]
    %v262 = vld [vmem:[#allocation5 + $0x260] sm:$0xff]
    %v263 = vld [vmem:[#allocation5 + $0x268] sm:$0xff]
    %v264 = vld [vmem:[#allocation5 + $0x270] sm:$0xff]
    %v265 = vld [vmem:[#allocation5 + $0x278] sm:$0xff]
    %v266 = vld [vmem:[#allocation5 + $0x280] sm:$0xff]
    %v267 = vld [vmem:[#allocation5 + $0x288] sm:$0xff]
    %v268 = vld [vmem:[#allocation5 + $0x290] sm:$0xff]
    %v269 = vld [vmem:[#allocation5 + $0x298] sm:$0xff]
    %v270 = vld [vmem:[#allocation5 + $0x2a0] sm:$0xff]
    %v271 = vld [vmem:[#allocation5 + $0x2a8] sm:$0xff]
    %v272 = vld [vmem:[#allocation5 + $0x2b0] sm:$0xff]
    %v273 = vld [vmem:[#allocation5 + $0x2b8] sm:$0xff]
    %v274 = vld [vmem:[#allocation5 + $0x2c0] sm:$0xff]
    %v275 = vld [vmem:[#allocation5 + $0x2c8] sm:$0xff]
    %v276 = vld [vmem:[#allocation5 + $0x2d0] sm:$0xff]
    %v277 = vld [vmem:[#allocation5 + $0x2d8] sm:$0xff]
    %v278 = vld [vmem:[#allocation5 + $0x2e0] sm:$0xff]
    %v279 = vld [vmem:[#allocation5 + $0x2e8] sm:$0xff]
    %v280 = vld [vmem:[#allocation5 + $0x2f0] sm:$0xff]
    %v281 = vld [vmem:[#allocation5 + $0x2f8] sm:$0xff]
    %v282 = vld [vmem:[#allocation5 + $0x300] sm:$0xff]
    %v283 = vld [vmem:[#allocation5 + $0x308] sm:$0xff]
    %v284 = vld [vmem:[#allocation5 + $0x310] sm:$0xff]
    %v285 = vld [vmem:[#allocation5 + $0x318] sm:$0xff]
    %v286 = vld [vmem:[#allocation5 + $0x320] sm:$0xff]
    %v287 = vld [vmem:[#allocation5 + $0x328] sm:$0xff]
    %v288 = vld [vmem:[#allocation5 + $0x330] sm:$0xff]
    %v289 = vld [vmem:[#allocation5 + $0x338] sm:$0xff]
    %v290 = vld [vmem:[#allocation5 + $0x340] sm:$0xff]
    %v291 = vld [vmem:[#allocation5 + $0x348] sm:$0xff]
    %v292 = vld [vmem:[#allocation5 + $0x350] sm:$0xff]
    %v293 = vld [vmem:[#allocation5 + $0x358] sm:$0xff]
    %v294 = vld [vmem:[#allocation5 + $0x360] sm:$0xff]
    %v295 = vld [vmem:[#allocation5 + $0x368] sm:$0xff]
    %v296 = vld [vmem:[#allocation5 + $0x370] sm:$0xff]
    %v297 = vld [vmem:[#allocation5 + $0x378] sm:$0xff]
    %v298 = vld [vmem:[#allocation5 + $0x380] sm:$0xff]
    %v299 = vld [vmem:[#allocation5 + $0x388] sm:$0xff]
    %v300 = vld [vmem:[#allocation5 + $0x390] sm:$0xff]
    %v301 = vld [vmem:[#allocation5 + $0x398] sm:$0xff]
    %v302 = vld [vmem:[#allocation5 + $0x3a0] sm:$0xff]
    %v303 = vld [vmem:[#allocation5 + $0x3a8] sm:$0xff]
    %v304 = vld [vmem:[#allocation5 + $0x3b0] sm:$0xff]
    %v305 = vld [vmem:[#allocation5 + $0x3b8] sm:$0xff]
    %v306 = vld [vmem:[#allocation5 + $0x3c0] sm:$0xff]
    %v307 = vld [vmem:[#allocation5 + $0x3c8] sm:$0xff]
    %v308 = vld [vmem:[#allocation5 + $0x3d0] sm:$0xff]
    %v309 = vld [vmem:[#allocation5 + $0x3d8] sm:$0xff]
    %v310 = vld [vmem:[#allocation5 + $0x3e0] sm:$0xff]
    %v311 = vld [vmem:[#allocation5 + $0x3e8] sm:$0xff]
    %v312 = vld [vmem:[#allocation5 + $0x3f0] sm:$0xff]
    %v313 = vld [vmem:[#allocation5 + $0x3f8] sm:$0xff]
    %v314 = vld [vmem:[#allocation5 + $0x400] sm:$0xff]
    %v315 = vld [vmem:[#allocation5 + $0x408] sm:$0xff]
    %v316 = vld [vmem:[#allocation5 + $0x410] sm:$0xff]
    %v317 = vld [vmem:[#allocation5 + $0x418] sm:$0xff]
    %v318 = vld [vmem:[#allocation5 + $0x420] sm:$0xff]
    %v319 = vld [vmem:[#allocation5 + $0x428] sm:$0xff]
    %v320 = vld [vmem:[#allocation5 + $0x430] sm:$0xff]
    %v321 = vld [vmem:[#allocation5 + $0x438] sm:$0xff]
    %v322 = vld [vmem:[#allocation5 + $0x440] sm:$0xff]
    %v323 = vld [vmem:[#allocation5 + $0x448] sm:$0xff]
    %v324 = vld [vmem:[#allocation5 + $0x450] sm:$0xff]
    %v325 = vld [vmem:[#allocation5 + $0x458] sm:$0xff]
    %v326 = vld [vmem:[#allocation5 + $0x460] sm:$0xff]
    %v327 = vld [vmem:[#allocation5 + $0x468] sm:$0xff]
    %v328 = vld [vmem:[#allocation5 + $0x470] sm:$0xff]
    %v329 = vld [vmem:[#allocation5 + $0x478] sm:$0xff]
    %v330 = vld [vmem:[#allocation5 + $0x480] sm:$0xff]
    %v331 = vld [vmem:[#allocation5 + $0x488] sm:$0xff]
    %v332 = vld [vmem:[#allocation5 + $0x490] sm:$0xff]
    %v333 = vld [vmem:[#allocation5 + $0x498] sm:$0xff]
    %v334 = vld [vmem:[#allocation5 + $0x4a0] sm:$0xff]
    %v335 = vld [vmem:[#allocation5 + $0x4a8] sm:$0xff]
    %v336 = vld [vmem:[#allocation5 + $0x4b0] sm:$0xff]
    %v337 = vld [vmem:[#allocation5 + $0x4b8] sm:$0xff]
    %v338 = vld [vmem:[#allocation5 + $0x4c0] sm:$0xff]
    %v339 = vld [vmem:[#allocation5 + $0x4c8] sm:$0xff]
    %v340 = vld [vmem:[#allocation5 + $0x4d0] sm:$0xff]
    %v341 = vld [vmem:[#allocation5 + $0x4d8] sm:$0xff]
    %v342 = vld [vmem:[#allocation5 + $0x4e0] sm:$0xff]
    %v343 = vld [vmem:[#allocation5 + $0x4e8] sm:$0xff]
    %v344 = vld [vmem:[#allocation5 + $0x4f0] sm:$0xff]
    %v345 = vld [vmem:[#allocation5 + $0x4f8] sm:$0xff]
    %v346 = vld [vmem:[#allocation5 + $0x500] sm:$0xff]
    %v347 = vld [vmem:[#allocation5 + $0x508] sm:$0xff]
    %v348 = vld [vmem:[#allocation5 + $0x510] sm:$0xff]
    %v349 = vld [vmem:[#allocation5 + $0x518] sm:$0xff]
    %v350 = vld [vmem:[#allocation5 + $0x520] sm:$0xff]
    %v351 = vld [vmem:[#allocation5 + $0x528] sm:$0xff]
    %v352 = vld [vmem:[#allocation5 + $0x530] sm:$0xff]
    %v353 = vld [vmem:[#allocation5 + $0x538] sm:$0xff]
    %v354 = vld [vmem:[#allocation5 + $0x540] sm:$0xff]
    %v355 = vld [vmem:[#allocation5 + $0x548] sm:$0xff]
    %v356 = vld [vmem:[#allocation5 + $0x550] sm:$0xff]
    %v357 = vld [vmem:[#allocation5 + $0x558] sm:$0xff]
    %v358 = vld [vmem:[#allocation5 + $0x560] sm:$0xff]
    %v359 = vld [vmem:[#allocation5 + $0x568] sm:$0xff]
    %v360 = vld [vmem:[#allocation5 + $0x570] sm:$0xff]
    %v361 = vld [vmem:[#allocation5 + $0x578] sm:$0xff]
    %v362 = vld [vmem:[#allocation5 + $0x580] sm:$0xff]
    %v363 = vld [vmem:[#allocation5 + $0x588] sm:$0xff]
    %v364 = vld [vmem:[#allocation5 + $0x590] sm:$0xff]
    %v365 = vld [vmem:[#allocation5 + $0x598] sm:$0xff]
    %v366 = vld [vmem:[#allocation5 + $0x5a0] sm:$0xff]
    %v367 = vld [vmem:[#allocation5 + $0x5a8] sm:$0xff]
    %v368 = vld [vmem:[#allocation5 + $0x5b0] sm:$0xff]
    %v369 = vld [vmem:[#allocation5 + $0x5b8] sm:$0xff]
    %v370 = vld [vmem:[#allocation5 + $0x5c0] sm:$0xff]
    %v371 = vld [vmem:[#allocation5 + $0x5c8] sm:$0xff]
    %v372 = vld [vmem:[#allocation5 + $0x5d0] sm:$0xff]
    %v373 = vld [vmem:[#allocation5 + $0x5d8] sm:$0xff]
    %v374 = vld [vmem:[#allocation5 + $0x5e0] sm:$0xff]
    %v375 = vld [vmem:[#allocation5 + $0x5e8] sm:$0xff]
    %v376 = vld [vmem:[#allocation5 + $0x5f0] sm:$0xff]
    %v377 = vld [vmem:[#allocation5 + $0x5f8] sm:$0xff]
    %v378 = vld [vmem:[#allocation5 + $0x600] sm:$0xff]
    %v379 = vld [vmem:[#allocation5 + $0x608] sm:$0xff]
    %v380 = vld [vmem:[#allocation5 + $0x610] sm:$0xff]
    %v381 = vld [vmem:[#allocation5 + $0x618] sm:$0xff]
    %v382 = vld [vmem:[#allocation5 + $0x620] sm:$0xff]
    %v383 = vld [vmem:[#allocation5 + $0x628] sm:$0xff]
    %v384 = vld [vmem:[#allocation5 + $0x630] sm:$0xff]
    %v385 = vld [vmem:[#allocation5 + $0x638] sm:$0xff]
    %v386 = vld [vmem:[#allocation5 + $0x640] sm:$0xff]
    %v387 = vld [vmem:[#allocation5 + $0x648] sm:$0xff]
    %v388 = vld [vmem:[#allocation5 + $0x650] sm:$0xff]
    %v389 = vld [vmem:[#allocation5 + $0x658] sm:$0xff]
    %v390 = vld [vmem:[#allocation5 + $0x660] sm:$0xff]
    %v391 = vld [vmem:[#allocation5 + $0x668] sm:$0xff]
    %v392 = vld [vmem:[#allocation5 + $0x670] sm:$0xff]
    %v393 = vld [vmem:[#allocation5 + $0x678] sm:$0xff]
    %v394 = vld [vmem:[#allocation5 + $0x680] sm:$0xff]
    %v395 = vld [vmem:[#allocation5 + $0x688] sm:$0xff]
    %v396 = vld [vmem:[#allocation5 + $0x690] sm:$0xff]
    %v397 = vld [vmem:[#allocation5 + $0x698] sm:$0xff]
    %v398 = vld [vmem:[#allocation5 + $0x6a0] sm:$0xff]
    %v399 = vld [vmem:[#allocation5 + $0x6a8] sm:$0xff]
    %v400 = vld [vmem:[#allocation5 + $0x6b0] sm:$0xff]
    %v401 = vld [vmem:[#allocation5 + $0x6b8] sm:$0xff]
    %v402 = vld [vmem:[#allocation5 + $0x6c0] sm:$0xff]
    %v403 = vld [vmem:[#allocation5 + $0x6c8] sm:$0xff]
    %v404 = vld [vmem:[#allocation5 + $0x6d0] sm:$0xff]
    %v405 = vld [vmem:[#allocation5 + $0x6d8] sm:$0xff]
    %v406 = vld [vmem:[#allocation5 + $0x6e0] sm:$0xff]
    %v407 = vld [vmem:[#allocation5 + $0x6e8] sm:$0xff]
    %v408 = vld [vmem:[#allocation5 + $0x6f0] sm:$0xff]
    %v409 = vld [vmem:[#allocation5 + $0x6f8] sm:$0xff]
    %v410 = vld [vmem:[#allocation5 + $0x700] sm:$0xff]
    %v411 = vld [vmem:[#allocation5 + $0x708] sm:$0xff]
    %v412 = vld [vmem:[#allocation5 + $0x710] sm:$0xff]
    %v413 = vld [vmem:[#allocation5 + $0x718] sm:$0xff]
    %v414 = vld [vmem:[#allocation5 + $0x720] sm:$0xff]
    %v415 = vld [vmem:[#allocation5 + $0x728] sm:$0xff]
    %v416 = vld [vmem:[#allocation5 + $0x730] sm:$0xff]
    %v417 = vld [vmem:[#allocation5 + $0x738] sm:$0xff]
    %v418 = vld [vmem:[#allocation5 + $0x740] sm:$0xff]
    %v419 = vld [vmem:[#allocation5 + $0x748] sm:$0xff]
    %v420 = vld [vmem:[#allocation5 + $0x750] sm:$0xff]
    %v421 = vld [vmem:[#allocation5 + $0x758] sm:$0xff]
    %v422 = vld [vmem:[#allocation5 + $0x760] sm:$0xff]
    %v423 = vld [vmem:[#allocation5 + $0x768] sm:$0xff]
    %v424 = vld [vmem:[#allocation5 + $0x770] sm:$0xff]
    %v425 = vld [vmem:[#allocation5 + $0x778] sm:$0xff]
    %v426 = vld [vmem:[#allocation7] sm:$0x7]
    %v428 = vperm.slane %v426, 0
    %v429 = vperm.slane %v426, 1
    %v430 = vperm.slane %v426, 2
    %434 = vmatpush.msra.mxu0 %v231
    %435 = vmatpush.msra.mxu0 %v228
    %436 = vmatpush.msra.mxu0 %v225
    %437 = vmatpush.msra.mxu0 %v222
    %438 = vmatpush.msra.mxu0 %v219
    %439 = vmatpush.msra.mxu0 %v216
    %440 = vmatpush.msra.mxu0 %v213
    %441 = vmatpush.msra.mxu0 %v210
    %442 = vmatpush.msra.mxu0 %v207
    %443 = vmatpush.msra.mxu0 %v204
    %444 = vmatpush.msra.mxu0 %v201
    %445 = vmatpush.msra.mxu0 %v198
    %446 = vmatpush.msra.mxu0 %v195
    %447 = vmatpush.msra.mxu0 %v192
    %448 = vmatpush.msra.mxu0 %v189
    %449 = vmatpush.msra.mxu0 %v186
    %450 = vmatmul.f32.gmra.mxu0 %v166
    %v451 = vpop.f32.mrf.mxu0
    %v452 = vadd.f32 %v428, %v451
    %453 = vmatmul.f32.gmra.mxu0 %v171
    %v454 = vpop.f32.mrf.mxu0
    %v455 = vadd.f32 %v428, %v454
    %456 = vmatmul.f32.gmra.mxu0 %v176
    %v457 = vpop.f32.mrf.mxu0
    %v458 = vadd.f32 %v428, %v457
    %459 = vmatmul.f32.gmra.mxu0 %v181
    %v460 = vpop.f32.mrf.mxu0
    %v461 = vadd.f32 %v428, %v460
    %462 = vdwg.mxu0
    %463 = vmatpush.msra.mxu0 %v279
    %464 = vmatpush.msra.mxu0 %v276
    %465 = vmatpush.msra.mxu0 %v273
    %466 = vmatpush.msra.mxu0 %v270
    %467 = vmatpush.msra.mxu0 %v267
    %468 = vmatpush.msra.mxu0 %v264
    %469 = vmatpush.msra.mxu0 %v261
    %470 = vmatpush.msra.mxu0 %v258
    %471 = vmatpush.msra.mxu0 %v255
    %472 = vmatpush.msra.mxu0 %v252
    %473 = vmatpush.msra.mxu0 %v249
    %474 = vmatpush.msra.mxu0 %v246
    %475 = vmatpush.msra.mxu0 %v243
    %476 = vmatpush.msra.mxu0 %v240
    %477 = vmatpush.msra.mxu0 %v237
    %478 = vmatpush.msra.mxu0 %v234
    %479 = vmatmul.f32.gmra.mxu0 %v167
    %v480 = vpop.f32.mrf.mxu0
    %v481 = vadd.f32 %v452, %v480
    %482 = vmatmul.f32.gmra.mxu0 %v172
    %v483 = vpop.f32.mrf.mxu0
    %v484 = vadd.f32 %v455, %v483
    %485 = vmatmul.f32.gmra.mxu0 %v177
    %v486 = vpop.f32.mrf.mxu0
    %v487 = vadd.f32 %v458, %v486
    %488 = vmatmul.f32.gmra.mxu0 %v182
    %v489 = vpop.f32.mrf.mxu0
    %v490 = vadd.f32 %v461, %v489
    %491 = vdwg.mxu0
    %492 = vmatpush.msra.mxu0 %v327
    %493 = vmatpush.msra.mxu0 %v324
    %494 = vmatpush.msra.mxu0 %v321
    %495 = vmatpush.msra.mxu0 %v318
    %496 = vmatpush.msra.mxu0 %v315
    %497 = vmatpush.msra.mxu0 %v312
    %498 = vmatpush.msra.mxu0 %v309
    %499 = vmatpush.msra.mxu0 %v306
    %500 = vmatpush.msra.mxu0 %v303
    %501 = vmatpush.msra.mxu0 %v300
    %502 = vmatpush.msra.mxu0 %v297
    %503 = vmatpush.msra.mxu0 %v294
    %504 = vmatpush.msra.mxu0 %v291
    %505 = vmatpush.msra.mxu0 %v288
    %506 = vmatpush.msra.mxu0 %v285
    %507 = vmatpush.msra.mxu0 %v282
    %508 = vmatmul.f32.gmra.mxu0 %v168
    %v509 = vpop.f32.mrf.mxu0
    %v510 = vadd.f32 %v481, %v509
    %511 = vmatmul.f32.gmra.mxu0 %v173
    %v512 = vpop.f32.mrf.mxu0
    %v513 = vadd.f32 %v484, %v512
    %514 = vmatmul.f32.gmra.mxu0 %v178
    %v515 = vpop.f32.mrf.mxu0
    %v516 = vadd.f32 %v487, %v515
    %517 = vmatmul.f32.gmra.mxu0 %v183
    %v518 = vpop.f32.mrf.mxu0
    %v519 = vadd.f32 %v490, %v518
    %520 = vdwg.mxu0
    %521 = vmatpush.msra.mxu0 %v375
    %522 = vmatpush.msra.mxu0 %v372
    %523 = vmatpush.msra.mxu0 %v369
    %524 = vmatpush.msra.mxu0 %v366
    %525 = vmatpush.msra.mxu0 %v363
    %526 = vmatpush.msra.mxu0 %v360
    %527 = vmatpush.msra.mxu0 %v357
    %528 = vmatpush.msra.mxu0 %v354
    %529 = vmatpush.msra.mxu0 %v351
    %530 = vmatpush.msra.mxu0 %v348
    %531 = vmatpush.msra.mxu0 %v345
    %532 = vmatpush.msra.mxu0 %v342
    %533 = vmatpush.msra.mxu0 %v339
    %534 = vmatpush.msra.mxu0 %v336
    %535 = vmatpush.msra.mxu0 %v333
    %536 = vmatpush.msra.mxu0 %v330
    %537 = vmatmul.f32.gmra.mxu0 %v169
    %v538 = vpop.f32.mrf.mxu0
    %v539 = vadd.f32 %v510, %v538
    %540 = vmatmul.f32.gmra.mxu0 %v174
    %v541 = vpop.f32.mrf.mxu0
    %v542 = vadd.f32 %v513, %v541
    %543 = vmatmul.f32.gmra.mxu0 %v179
    %v544 = vpop.f32.mrf.mxu0
    %v545 = vadd.f32 %v516, %v544
    %546 = vmatmul.f32.gmra.mxu0 %v184
    %v547 = vpop.f32.mrf.mxu0
    %v548 = vadd.f32 %v519, %v547
    %549 = vdwg.mxu0
    %550 = vmatpush.msra.mxu0 %v423
    %551 = vmatpush.msra.mxu0 %v420
    %552 = vmatpush.msra.mxu0 %v417
    %553 = vmatpush.msra.mxu0 %v414
    %554 = vmatpush.msra.mxu0 %v411
    %555 = vmatpush.msra.mxu0 %v408
    %556 = vmatpush.msra.mxu0 %v405
    %557 = vmatpush.msra.mxu0 %v402
    %558 = vmatpush.msra.mxu0 %v399
    %559 = vmatpush.msra.mxu0 %v396
    %560 = vmatpush.msra.mxu0 %v393
    %561 = vmatpush.msra.mxu0 %v390
    %562 = vmatpush.msra.mxu0 %v387
    %563 = vmatpush.msra.mxu0 %v384
    %564 = vmatpush.msra.mxu0 %v381
    %565 = vmatpush.msra.mxu0 %v378
    %566 = vmatmul.f32.gmra.mxu0 %v170
    %v567 = vpop.f32.mrf.mxu0
    %v568 = vadd.f32 %v539, %v567
    %569 = vmatmul.f32.gmra.mxu0 %v175
    %v570 = vpop.f32.mrf.mxu0
    %v571 = vadd.f32 %v542, %v570
    %572 = vmatmul.f32.gmra.mxu0 %v180
    %v573 = vpop.f32.mrf.mxu0
    %v574 = vadd.f32 %v545, %v573
    %575 = vmatmul.f32.gmra.mxu0 %v185
    %v576 = vpop.f32.mrf.mxu0
    %v577 = vadd.f32 %v548, %v576
    %578 = vdwg.mxu0
    %579 = vmatpush.msra.mxu0 %v232
    %580 = vmatpush.msra.mxu0 %v229
    %581 = vmatpush.msra.mxu0 %v226
    %582 = vmatpush.msra.mxu0 %v223
    %583 = vmatpush.msra.mxu0 %v220
    %584 = vmatpush.msra.mxu0 %v217
    %585 = vmatpush.msra.mxu0 %v214
    %586 = vmatpush.msra.mxu0 %v211
    %587 = vmatpush.msra.mxu0 %v208
    %588 = vmatpush.msra.mxu0 %v205
    %589 = vmatpush.msra.mxu0 %v202
    %590 = vmatpush.msra.mxu0 %v199
    %591 = vmatpush.msra.mxu0 %v196
    %592 = vmatpush.msra.mxu0 %v193
    %593 = vmatpush.msra.mxu0 %v190
    %594 = vmatpush.msra.mxu0 %v187
    %595 = vmatmul.f32.gmra.mxu0 %v166
    %v596 = vpop.f32.mrf.mxu0
    %v597 = vadd.f32 %v429, %v596
    %598 = vmatmul.f32.gmra.mxu0 %v171
    %v599 = vpop.f32.mrf.mxu0
    %v600 = vadd.f32 %v429, %v599
    %601 = vmatmul.f32.gmra.mxu0 %v176
    %v602 = vpop.f32.mrf.mxu0
    %v603 = vadd.f32 %v429, %v602
    %604 = vmatmul.f32.gmra.mxu0 %v181
    %v605 = vpop.f32.mrf.mxu0
    %v606 = vadd.f32 %v429, %v605
    %607 = vdwg.mxu0
    %608 = vmatpush.msra.mxu0 %v280
    %609 = vmatpush.msra.mxu0 %v277
    %610 = vmatpush.msra.mxu0 %v274
    %611 = vmatpush.msra.mxu0 %v271
    %612 = vmatpush.msra.mxu0 %v268
    %613 = vmatpush.msra.mxu0 %v265
    %614 = vmatpush.msra.mxu0 %v262
    %615 = vmatpush.msra.mxu0 %v259
    %616 = vmatpush.msra.mxu0 %v256
    %617 = vmatpush.msra.mxu0 %v253
    %618 = vmatpush.msra.mxu0 %v250
    %619 = vmatpush.msra.mxu0 %v247
    %620 = vmatpush.msra.mxu0 %v244
    %621 = vmatpush.msra.mxu0 %v241
    %622 = vmatpush.msra.mxu0 %v238
    %623 = vmatpush.msra.mxu0 %v235
    %624 = vmatmul.f32.gmra.mxu0 %v167
    %v625 = vpop.f32.mrf.mxu0
    %v626 = vadd.f32 %v597, %v625
    %627 = vmatmul.f32.gmra.mxu0 %v172
    %v628 = vpop.f32.mrf.mxu0
    %v629 = vadd.f32 %v600, %v628
    %630 = vmatmul.f32.gmra.mxu0 %v177
    %v631 = vpop.f32.mrf.mxu0
    %v632 = vadd.f32 %v603, %v631
    %633 = vmatmul.f32.gmra.mxu0 %v182
    %v634 = vpop.f32.mrf.mxu0
    %v635 = vadd.f32 %v606, %v634
    %636 = vdwg.mxu0
    %637 = vmatpush.msra.mxu0 %v328
    %638 = vmatpush.msra.mxu0 %v325
    %639 = vmatpush.msra.mxu0 %v322
    %640 = vmatpush.msra.mxu0 %v319
    %641 = vmatpush.msra.mxu0 %v316
    %642 = vmatpush.msra.mxu0 %v313
    %643 = vmatpush.msra.mxu0 %v310
    %644 = vmatpush.msra.mxu0 %v307
    %645 = vmatpush.msra.mxu0 %v304
    %646 = vmatpush.msra.mxu0 %v301
    %647 = vmatpush.msra.mxu0 %v298
    %648 = vmatpush.msra.mxu0 %v295
    %649 = vmatpush.msra.mxu0 %v292
    %650 = vmatpush.msra.mxu0 %v289
    %651 = vmatpush.msra.mxu0 %v286
    %652 = vmatpush.msra.mxu0 %v283
    %653 = vmatmul.f32.gmra.mxu0 %v168
    %v654 = vpop.f32.mrf.mxu0
    %v655 = vadd.f32 %v626, %v654
    %656 = vmatmul.f32.gmra.mxu0 %v173
    %v657 = vpop.f32.mrf.mxu0
    %v658 = vadd.f32 %v629, %v657
    %659 = vmatmul.f32.gmra.mxu0 %v178
    %v660 = vpop.f32.mrf.mxu0
    %v661 = vadd.f32 %v632, %v660
    %662 = vmatmul.f32.gmra.mxu0 %v183
    %v663 = vpop.f32.mrf.mxu0
    %v664 = vadd.f32 %v635, %v663
    %665 = vdwg.mxu0
    %666 = vmatpush.msra.mxu0 %v376
    %667 = vmatpush.msra.mxu0 %v373
    %668 = vmatpush.msra.mxu0 %v370
    %669 = vmatpush.msra.mxu0 %v367
    %670 = vmatpush.msra.mxu0 %v364
    %671 = vmatpush.msra.mxu0 %v361
    %672 = vmatpush.msra.mxu0 %v358
    %673 = vmatpush.msra.mxu0 %v355
    %674 = vmatpush.msra.mxu0 %v352
    %675 = vmatpush.msra.mxu0 %v349
    %676 = vmatpush.msra.mxu0 %v346
    %677 = vmatpush.msra.mxu0 %v343
    %678 = vmatpush.msra.mxu0 %v340
    %679 = vmatpush.msra.mxu0 %v337
    %680 = vmatpush.msra.mxu0 %v334
    %681 = vmatpush.msra.mxu0 %v331
    %682 = vmatmul.f32.gmra.mxu0 %v169
    %v683 = vpop.f32.mrf.mxu0
    %v684 = vadd.f32 %v655, %v683
    %685 = vmatmul.f32.gmra.mxu0 %v174
    %v686 = vpop.f32.mrf.mxu0
    %v687 = vadd.f32 %v658, %v686
    %688 = vmatmul.f32.gmra.mxu0 %v179
    %v689 = vpop.f32.mrf.mxu0
    %v690 = vadd.f32 %v661, %v689
    %691 = vmatmul.f32.gmra.mxu0 %v184
    %v692 = vpop.f32.mrf.mxu0
    %v693 = vadd.f32 %v664, %v692
    %694 = vdwg.mxu0
    %695 = vmatpush.msra.mxu0 %v424
    %696 = vmatpush.msra.mxu0 %v421
    %697 = vmatpush.msra.mxu0 %v418
    %698 = vmatpush.msra.mxu0 %v415
    %699 = vmatpush.msra.mxu0 %v412
    %700 = vmatpush.msra.mxu0 %v409
    %701 = vmatpush.msra.mxu0 %v406
    %702 = vmatpush.msra.mxu0 %v403
    %703 = vmatpush.msra.mxu0 %v400
    %704 = vmatpush.msra.mxu0 %v397
    %705 = vmatpush.msra.mxu0 %v394
    %706 = vmatpush.msra.mxu0 %v391
    %707 = vmatpush.msra.mxu0 %v388
    %708 = vmatpush.msra.mxu0 %v385
    %709 = vmatpush.msra.mxu0 %v382
    %710 = vmatpush.msra.mxu0 %v379
    %711 = vmatmul.f32.gmra.mxu0 %v170
    %v712 = vpop.f32.mrf.mxu0
    %v713 = vadd.f32 %v684, %v712
    %714 = vmatmul.f32.gmra.mxu0 %v175
    %v715 = vpop.f32.mrf.mxu0
    %v716 = vadd.f32 %v687, %v715
    %717 = vmatmul.f32.gmra.mxu0 %v180
    %v718 = vpop.f32.mrf.mxu0
    %v719 = vadd.f32 %v690, %v718
    %720 = vmatmul.f32.gmra.mxu0 %v185
    %v721 = vpop.f32.mrf.mxu0
    %v722 = vadd.f32 %v693, %v721
    %723 = vdwg.mxu0
    %724 = vmatpush.msra.mxu0 %v233
    %725 = vmatpush.msra.mxu0 %v230
    %726 = vmatpush.msra.mxu0 %v227
    %727 = vmatpush.msra.mxu0 %v224
    %728 = vmatpush.msra.mxu0 %v221
    %729 = vmatpush.msra.mxu0 %v218
    %730 = vmatpush.msra.mxu0 %v215
    %731 = vmatpush.msra.mxu0 %v212
    %732 = vmatpush.msra.mxu0 %v209
    %733 = vmatpush.msra.mxu0 %v206
    %734 = vmatpush.msra.mxu0 %v203
    %735 = vmatpush.msra.mxu0 %v200
    %736 = vmatpush.msra.mxu0 %v197
    %737 = vmatpush.msra.mxu0 %v194
    %738 = vmatpush.msra.mxu0 %v191
    %739 = vmatpush.msra.mxu0 %v188
    %740 = vmatmul.f32.gmra.mxu0 %v166
    %v741 = vpop.f32.mrf.mxu0
    %v742 = vadd.f32 %v430, %v741
    %743 = vmatmul.f32.gmra.mxu0 %v171
    %v744 = vpop.f32.mrf.mxu0
    %v745 = vadd.f32 %v430, %v744
    %746 = vmatmul.f32.gmra.mxu0 %v176
    %v747 = vpop.f32.mrf.mxu0
    %v748 = vadd.f32 %v430, %v747
    %749 = vmatmul.f32.gmra.mxu0 %v181
    %v750 = vpop.f32.mrf.mxu0
    %v751 = vadd.f32 %v430, %v750
    %752 = vdwg.mxu0
    %753 = vmatpush.msra.mxu0 %v281
    %754 = vmatpush.msra.mxu0 %v278
    %755 = vmatpush.msra.mxu0 %v275
    %756 = vmatpush.msra.mxu0 %v272
    %757 = vmatpush.msra.mxu0 %v269
    %758 = vmatpush.msra.mxu0 %v266
    %759 = vmatpush.msra.mxu0 %v263
    %760 = vmatpush.msra.mxu0 %v260
    %761 = vmatpush.msra.mxu0 %v257
    %762 = vmatpush.msra.mxu0 %v254
    %763 = vmatpush.msra.mxu0 %v251
    %764 = vmatpush.msra.mxu0 %v248
    %765 = vmatpush.msra.mxu0 %v245
    %766 = vmatpush.msra.mxu0 %v242
    %767 = vmatpush.msra.mxu0 %v239
    %768 = vmatpush.msra.mxu0 %v236
    %769 = vmatmul.f32.gmra.mxu0 %v167
    %v770 = vpop.f32.mrf.mxu0
    %v771 = vadd.f32 %v742, %v770
    %772 = vmatmul.f32.gmra.mxu0 %v172
    %v773 = vpop.f32.mrf.mxu0
    %v774 = vadd.f32 %v745, %v773
    %775 = vmatmul.f32.gmra.mxu0 %v177
    %v776 = vpop.f32.mrf.mxu0
    %v777 = vadd.f32 %v748, %v776
    %778 = vmatmul.f32.gmra.mxu0 %v182
    %v779 = vpop.f32.mrf.mxu0
    %v780 = vadd.f32 %v751, %v779
    %781 = vdwg.mxu0
    %782 = vmatpush.msra.mxu0 %v329
    %783 = vmatpush.msra.mxu0 %v326
    %784 = vmatpush.msra.mxu0 %v323
    %785 = vmatpush.msra.mxu0 %v320
    %786 = vmatpush.msra.mxu0 %v317
    %787 = vmatpush.msra.mxu0 %v314
    %788 = vmatpush.msra.mxu0 %v311
    %789 = vmatpush.msra.mxu0 %v308
    %790 = vmatpush.msra.mxu0 %v305
    %791 = vmatpush.msra.mxu0 %v302
    %792 = vmatpush.msra.mxu0 %v299
    %793 = vmatpush.msra.mxu0 %v296
    %794 = vmatpush.msra.mxu0 %v293
    %795 = vmatpush.msra.mxu0 %v290
    %796 = vmatpush.msra.mxu0 %v287
    %797 = vmatpush.msra.mxu0 %v284
    %798 = vmatmul.f32.gmra.mxu0 %v168
    %v799 = vpop.f32.mrf.mxu0
    %v800 = vadd.f32 %v771, %v799
    %801 = vmatmul.f32.gmra.mxu0 %v173
    %v802 = vpop.f32.mrf.mxu0
    %v803 = vadd.f32 %v774, %v802
    %804 = vmatmul.f32.gmra.mxu0 %v178
    %v805 = vpop.f32.mrf.mxu0
    %v806 = vadd.f32 %v777, %v805
    %807 = vmatmul.f32.gmra.mxu0 %v183
    %v808 = vpop.f32.mrf.mxu0
    %v809 = vadd.f32 %v780, %v808
    %810 = vdwg.mxu0
    %811 = vmatpush.msra.mxu0 %v377
    %812 = vmatpush.msra.mxu0 %v374
    %813 = vmatpush.msra.mxu0 %v371
    %814 = vmatpush.msra.mxu0 %v368
    %815 = vmatpush.msra.mxu0 %v365
    %816 = vmatpush.msra.mxu0 %v362
    %817 = vmatpush.msra.mxu0 %v359
    %818 = vmatpush.msra.mxu0 %v356
    %819 = vmatpush.msra.mxu0 %v353
    %820 = vmatpush.msra.mxu0 %v350
    %821 = vmatpush.msra.mxu0 %v347
    %822 = vmatpush.msra.mxu0 %v344
    %823 = vmatpush.msra.mxu0 %v341
    %824 = vmatpush.msra.mxu0 %v338
    %825 = vmatpush.msra.mxu0 %v335
    %826 = vmatpush.msra.mxu0 %v332
    %827 = vmatmul.f32.gmra.mxu0 %v169
    %v828 = vpop.f32.mrf.mxu0
    %v829 = vadd.f32 %v800, %v828
    %830 = vmatmul.f32.gmra.mxu0 %v174
    %v831 = vpop.f32.mrf.mxu0
    %v832 = vadd.f32 %v803, %v831
    %833 = vmatmul.f32.gmra.mxu0 %v179
    %v834 = vpop.f32.mrf.mxu0
    %v835 = vadd.f32 %v806, %v834
    %836 = vmatmul.f32.gmra.mxu0 %v184
    %v837 = vpop.f32.mrf.mxu0
    %v838 = vadd.f32 %v809, %v837
    %839 = vdwg.mxu0
    %840 = vmatpush.msra.mxu0 %v425
    %841 = vmatpush.msra.mxu0 %v422
    %842 = vmatpush.msra.mxu0 %v419
    %843 = vmatpush.msra.mxu0 %v416
    %844 = vmatpush.msra.mxu0 %v413
    %845 = vmatpush.msra.mxu0 %v410
    %846 = vmatpush.msra.mxu0 %v407
    %847 = vmatpush.msra.mxu0 %v404
    %848 = vmatpush.msra.mxu0 %v401
    %849 = vmatpush.msra.mxu0 %v398
    %850 = vmatpush.msra.mxu0 %v395
    %851 = vmatpush.msra.mxu0 %v392
    %852 = vmatpush.msra.mxu0 %v389
    %853 = vmatpush.msra.mxu0 %v386
    %854 = vmatpush.msra.mxu0 %v383
    %855 = vmatpush.msra.mxu0 %v380
    %856 = vmatmul.f32.gmra.mxu0 %v170
    %v857 = vpop.f32.mrf.mxu0
    %v858 = vadd.f32 %v829, %v857
    %859 = vmatmul.f32.gmra.mxu0 %v175
    %v860 = vpop.f32.mrf.mxu0
    %v861 = vadd.f32 %v832, %v860
    %862 = vmatmul.f32.gmra.mxu0 %v180
    %v863 = vpop.f32.mrf.mxu0
    %v864 = vadd.f32 %v835, %v863
    %865 = vmatmul.f32.gmra.mxu0 %v185
    %v866 = vpop.f32.mrf.mxu0
    %v867 = vadd.f32 %v838, %v866
    %868 = vdwg.mxu0
    %v869 = vmax.f32 %v568, 0.0
    %v870 = vmax.f32 %v713, 0.0
    %v871 = vmax.f32 %v858, 0.0
    %v872 = vmax.f32 %v571, 0.0
    %v873 = vmax.f32 %v716, 0.0
    %v874 = vmax.f32 %v861, 0.0
    %v875 = vmax.f32 %v574, 0.0
    %v876 = vmax.f32 %v719, 0.0
    %v877 = vmax.f32 %v864, 0.0
    %v878 = vmax.f32 %v577, 0.0
    %v879 = vmax.f32 %v722, 0.0
    %v880 = vmax.f32 %v867, 0.0
    %v881 = vld [vmem:[#allocation8] sm:$0xff]
    %v882 = vld [vmem:[#allocation8 + $0x8] sm:$0xff]
    %v883 = vld [vmem:[#allocation8 + $0x10] sm:$0xff]
    %v884 = vld [vmem:[#allocation8 + $0x18] sm:$0xff]
    %v885 = vld [vmem:[#allocation8 + $0x20] sm:$0xff]
    %v886 = vld [vmem:[#allocation8 + $0x28] sm:$0xff]
    %v887 = vld [vmem:[#allocation8 + $0x30] sm:$0xff]
    %v888 = vld [vmem:[#allocation8 + $0x38] sm:$0xff]
    %v889 = vld [vmem:[#allocation8 + $0x40] sm:$0xff]
    %v890 = vld [vmem:[#allocation8 + $0x48] sm:$0xff]
    %v891 = vld [vmem:[#allocation8 + $0x50] sm:$0xff]
    %v892 = vld [vmem:[#allocation8 + $0x58] sm:$0xff]
    %v893 = vmul.f32 %v869, %v881
    %v894 = vmul.f32 %v870, %v882
    %v895 = vmul.f32 %v871, %v883
    %v896 = vmul.f32 %v872, %v884
    %v897 = vmul.f32 %v873, %v885
    %v898 = vmul.f32 %v874, %v886
    %v899 = vmul.f32 %v875, %v887
    %v900 = vmul.f32 %v876, %v888
    %v901 = vmul.f32 %v877, %v889
    %v902 = vmul.f32 %v878, %v890
    %v903 = vmul.f32 %v879, %v891
    %v904 = vmul.f32 %v880, %v892
    %v905 = vmax.f32 %v893, %v896
    %v906 = vrot.slane %v905, 4
    %v907 = vmax.f32 %v905, %v906
    %v908 = vrot.slane %v907, 2
    %v909 = vmax.f32 %v907, %v908
    %v910 = vrot.slane %v909, 1
    %v911 = vmax.f32 %v909, %v910
    %v912 = vmax.f32 %v894, %v897
    %v913 = vrot.slane %v912, 4
    %v914 = vmax.f32 %v912, %v913
    %v915 = vrot.slane %v914, 2
    %v916 = vmax.f32 %v914, %v915
    %v917 = vrot.slane %v916, 1
    %v918 = vmax.f32 %v916, %v917
    %v919 = vmax.f32 %v895, %v898
    %v920 = vrot.slane %v919, 4
    %v921 = vmax.f32 %v919, %v920
    %v922 = vrot.slane %v921, 2
    %v923 = vmax.f32 %v921, %v922
    %v924 = vrot.slane %v923, 1
    %v925 = vmax.f32 %v923, %v924
    %v926 = vmax.f32 %v899, %v902
    %v927 = vrot.slane %v926, 4
    %v928 = vmax.f32 %v926, %v927
    %v929 = vrot.slane %v928, 2
    %v930 = vmax.f32 %v928, %v929
    %v931 = vrot.slane %v930, 1
    %v932 = vmax.f32 %v930, %v931
    %v933 = vmax.f32 %v900, %v903
    %v934 = vrot.slane %v933, 4
    %v935 = vmax.f32 %v933, %v934
    %v936 = vrot.slane %v935, 2
    %v937 = vmax.f32 %v935, %v936
    %v938 = vrot.slane %v937, 1
    %v939 = vmax.f32 %v937, %v938
    %v940 = vmax.f32 %v901, %v904
    %v941 = vrot.slane %v940, 4
    %v942 = vmax.f32 %v940, %v941
    %v943 = vrot.slane %v942, 2
    %v944 = vmax.f32 %v942, %v943
    %v945 = vrot.slane %v944, 1
    %v946 = vmax.f32 %v944, %v945
    %v947 = vld [vmem:[#allocation10] sm:$0xff]
    %v948 = vld [vmem:[#allocation10 + $0x8] sm:$0xff]
    %v949 = vld [vmem:[#allocation10 + $0x10] sm:$0xff]
    %v950 = vld [vmem:[#allocation10 + $0x18] sm:$0xff]
    %v951 = vld [vmem:[#allocation10 + $0x20] sm:$0xff]
    %v952 = vld [vmem:[#allocation10 + $0x28] sm:$0xff]
    %v953 = vld [vmem:[#allocation10 + $0x30] sm:$0xff]
    %v954 = vld [vmem:[#allocation10 + $0x38] sm:$0xff]
    %v955 = vld [vmem:[#allocation10 + $0x40] sm:$0xff]
    %v956 = vld [vmem:[#allocation10 + $0x48] sm:$0xff]
    %v957 = vld [vmem:[#allocation10 + $0x50] sm:$0xff]
    %v958 = vld [vmem:[#allocation10 + $0x58] sm:$0xff]
    %v959 = vld [vmem:[#allocation10 + $0x60] sm:$0xff]
    %v960 = vld [vmem:[#allocation10 + $0x68] sm:$0xff]
    %v961 = vld [vmem:[#allocation10 + $0x70] sm:$0xff]
    %v962 = vld [vmem:[#allocation10 + $0x78] sm:$0xff]
    %v963 = vld [vmem:[#allocation10 + $0x80] sm:$0xff]
    %v964 = vld [vmem:[#allocation10 + $0x88] sm:$0xff]
    %v965 = vld [vmem:[#allocation10 + $0x90] sm:$0xff]
    %v966 = vld [vmem:[#allocation10 + $0x98] sm:$0xff]
    %v967 = vld [vmem:[#allocation10 + $0xa0] sm:$0xff]
    %v968 = vld [vmem:[#allocation10 + $0xa8] sm:$0xff]
    %v969 = vld [vmem:[#allocation10 + $0xb0] sm:$0xff]
    %v970 = vld [vmem:[#allocation10 + $0xb8] sm:$0xff]
    %v971 = vld [vmem:[#allocation10 + $0xc0] sm:$0xff]
    %v972 = vld [vmem:[#allocation10 + $0xc8] sm:$0xff]
    %v973 = vld [vmem:[#allocation10 + $0xd0] sm:$0xff]
    %v974 = vld [vmem:[#allocation10 + $0xd8] sm:$0xff]
    %v975 = vld [vmem:[#allocation10 + $0xe0] sm:$0xff]
    %v976 = vld [vmem:[#allocation10 + $0xe8] sm:$0xff]
    %v977 = vld [vmem:[#allocation10 + $0xf0] sm:$0xff]
    %v978 = vld [vmem:[#allocation10 + $0xf8] sm:$0xff]
    %v979 = vld [vmem:[#allocation10 + $0x100] sm:$0xff]
    %v980 = vld [vmem:[#allocation10 + $0x108] sm:$0xff]
    %v981 = vld [vmem:[#allocation10 + $0x110] sm:$0xff]
    %v982 = vld [vmem:[#allocation10 + $0x118] sm:$0xff]
    %v983 = vld [vmem:[#allocation10 + $0x120] sm:$0xff]
    %v984 = vld [vmem:[#allocation10 + $0x128] sm:$0xff]
    %v985 = vld [vmem:[#allocation10 + $0x130] sm:$0xff]
    %v986 = vld [vmem:[#allocation10 + $0x138] sm:$0xff]
    %v987 = vld [vmem:[#allocation10 + $0x140] sm:$0xff]
    %v988 = vld [vmem:[#allocation10 + $0x148] sm:$0xff]
    %v989 = vld [vmem:[#allocation10 + $0x150] sm:$0xff]
    %v990 = vld [vmem:[#allocation10 + $0x158] sm:$0xff]
    %v991 = vld [vmem:[#allocation10 + $0x160] sm:$0xff]
    %v992 = vld [vmem:[#allocation10 + $0x168] sm:$0xff]
    %v993 = vld [vmem:[#allocation10 + $0x170] sm:$0xff]
    %v994 = vld [vmem:[#allocation10 + $0x178] sm:$0xff]
    %v995 = vld [vmem:[%s5] sm:$0x1]
    %v997 = vperm.slane %v995, 0
    %vm1005 = vcmask 1041409
    %v1006 = vsel %vm1005, %v932, %v911
    %v1007 = vsel %vm1005, %v939, %v918
    %v1008 = vsel %vm1005, %v946, %v925
    %1012 = vmatpush.msra.mxu0 %v962
    %1013 = vmatpush.msra.mxu0 %v961
    %1014 = vmatpush.msra.mxu0 %v960
    %1015 = vmatpush.msra.mxu0 %v959
    %1016 = vmatpush.msra.mxu0 %v958
    %1017 = vmatpush.msra.mxu0 %v957
    %1018 = vmatpush.msra.mxu0 %v956
    %1019 = vmatpush.msra.mxu0 %v955
    %1020 = vmatpush.msra.mxu0 %v954
    %1021 = vmatpush.msra.mxu0 %v953
    %1022 = vmatpush.msra.mxu0 %v952
    %1023 = vmatpush.msra.mxu0 %v951
    %1024 = vmatpush.msra.mxu0 %v950
    %1025 = vmatpush.msra.mxu0 %v949
    %1026 = vmatpush.msra.mxu0 %v948
    %1027 = vmatpush.msra.mxu0 %v947
    %1028 = vmatmul.f32.gmra.mxu0 %v1006
    %v1029 = vpop.f32.mrf.mxu0
    %v1030 = vadd.f32 %v997, %v1029
    %1031 = vdwg.mxu0
    %1032 = vmatpush.msra.mxu0 %v978
    %1033 = vmatpush.msra.mxu0 %v977
    %1034 = vmatpush.msra.mxu0 %v976
    %1035 = vmatpush.msra.mxu0 %v975
    %1036 = vmatpush.msra.mxu0 %v974
    %1037 = vmatpush.msra.mxu0 %v973
    %1038 = vmatpush.msra.mxu0 %v972
    %1039 = vmatpush.msra.mxu0 %v971
    %1040 = vmatpush.msra.mxu0 %v970
    %1041 = vmatpush.msra.mxu0 %v969
    %1042 = vmatpush.msra.mxu0 %v968
    %1043 = vmatpush.msra.mxu0 %v967
    %1044 = vmatpush.msra.mxu0 %v966
    %1045 = vmatpush.msra.mxu0 %v965
    %1046 = vmatpush.msra.mxu0 %v964
    %1047 = vmatpush.msra.mxu0 %v963
    %1048 = vmatmul.f32.gmra.mxu0 %v1007
    %v1049 = vpop.f32.mrf.mxu0
    %v1050 = vadd.f32 %v1030, %v1049
    %1051 = vdwg.mxu0
    %1052 = vmatpush.msra.mxu0 %v994
    %1053 = vmatpush.msra.mxu0 %v993
    %1054 = vmatpush.msra.mxu0 %v992
    %1055 = vmatpush.msra.mxu0 %v991
    %1056 = vmatpush.msra.mxu0 %v990
    %1057 = vmatpush.msra.mxu0 %v989
    %1058 = vmatpush.msra.mxu0 %v988
    %1059 = vmatpush.msra.mxu0 %v987
    %1060 = vmatpush.msra.mxu0 %v986
    %1061 = vmatpush.msra.mxu0 %v985
    %1062 = vmatpush.msra.mxu0 %v984
    %1063 = vmatpush.msra.mxu0 %v983
    %1064 = vmatpush.msra.mxu0 %v982
    %1065 = vmatpush.msra.mxu0 %v981
    %1066 = vmatpush.msra.mxu0 %v980
    %1067 = vmatpush.msra.mxu0 %v979
    %1068 = vmatmul.f32.gmra.mxu0 %v1008
    %v1069 = vpop.f32.mrf.mxu0
    %v1070 = vadd.f32 %v1050, %v1069
    %1071 = vdwg.mxu0
    %1072 = vst [vmem:[#allocation11] sm:$0x3] %v1070
    // Predicated region
    $region46: #{tpu_custom_call.1} parent=1 // pred_check
      _
    $region47: #{tpu_custom_call.1} parent=1 // pred_check_branch
      %1074 = sbr.rel (0) target = $region49
    $region48: #{tpu_custom_call.1} parent=1 // pred_region
      %1076 = vsyncadd [#allocation4], 0
      %s1078 = sshll.u32 [#allocation11], 4
      %s1079 = int_to_ptr.vmem [resolvable:$true] %s1078
      %s1080 = sshll.u32 %s6, 4
      %s1081 = int_to_ptr.hbm [resolvable:$true] %s1080
      %1083 = dma.vmem_to_hbm [thread:$0]  %s1079, 32, %s1081, [#allocation4]
    $region49: #{tpu_custom_call.1} parent=1 // pred_fallthru
      _
    // Predicated region
    $region50: #{tpu_custom_call.1} parent=1 // pred_check
      _
    $region51: #{tpu_custom_call.1} parent=1 // pred_check_branch
      %1085 = sbr.rel (0) target = $region53
    $region52: #{tpu_custom_call.1} parent=1 // pred_region
      %1087 = dma.done [#allocation4], 32
    $region53: #{tpu_custom_call.1} parent=1 // pred_fallthru
      _
    %1088 = vsyncpa [#allocation3], 1
    %1089 = vsyncpa [#allocation6], 1
    %1090 = vsyncpa [#allocation9], 1
    %1091 = vsyncpa [#allocation4], 1

</llo_original>
